<compile_context>
chip_gen: v6e
topology: v6e:2x2x1
jax: 0.10.0
libtpu: 0.0.40
codegen_flags: <defaults>
</compile_context>

<pallas_src>
import jax
import jax.numpy as jnp
from jax.experimental import pallas as pl
from jax.experimental.pallas import tpu as pltpu

STATE_SIZE = 8
ACTION_SIZE = 4
HIDDEN = 64


def _round_up(x, m):
    return ((int(x) + m - 1) // m) * m


def _policy_kernel(x_ref, w1_ref, b1_ref, w2_ref, b2_ref, w3_ref, b3_ref, o_ref):
    # x: (tile_b, STATE_SIZE) f32 (cast to bf16 here, hidden under MXU/DMA slack);
    # weights bf16 (VMEM-resident); biases f32.
    x = x_ref[...].astype(jnp.bfloat16)

    # fc1 + ReLU  (MXU in bf16, accumulate f32, elementwise f32)
    h1 = jnp.dot(x, w1_ref[...], preferred_element_type=jnp.float32) + b1_ref[...]
    h1 = jnp.maximum(h1, 0.0).astype(jnp.bfloat16)

    # fc2 + ReLU
    h2 = jnp.dot(h1, w2_ref[...], preferred_element_type=jnp.float32) + b2_ref[...]
    h2 = jnp.maximum(h2, 0.0).astype(jnp.bfloat16)

    # fc3 logits (f32)
    logits = jnp.dot(h2, w3_ref[...], preferred_element_type=jnp.float32) + b3_ref[...]

    # numerically stable softmax over actions; exact reciprocal, still on the
    # (otherwise idle) EUP slot so rows sum to 1 for downstream log-probs.
    m = jnp.max(logits, axis=-1, keepdims=True)
    e = jnp.exp(logits - m)
    denom = jnp.sum(e, axis=-1, keepdims=True)
    o_ref[...] = e * pl.reciprocal(denom, approx=False)


def policy_network_forward(state, params, *, tile_b=4096):
    """state: (B, STATE_SIZE) float; returns (B, ACTION_SIZE) f32 action probs.

    The kernel pays off when amortized over many rows per call (per-grid-step
    overhead ~0.35us); batch many env states per call for rollouts.
    """
    B = state.shape[0]
    x = state.astype(jnp.float32)  # bf16 cast happens inside the kernel

    # Small resident weights: cast once at the boundary (~18 KB total).
    w1 = params["w1"].astype(jnp.bfloat16)
    w2 = params["w2"].astype(jnp.bfloat16)
    w3 = params["w3"].astype(jnp.bfloat16)
    b1 = params["b1"].astype(jnp.float32)
    b2 = params["b2"].astype(jnp.float32)
    b3 = params["b3"].astype(jnp.float32)

    # Tile selection: pick the tile count first, then size tiles to fit.
    #  - large default tile (4096 rows) so per-step DMA amortizes grid overhead
    #  - >= 2 tiles whenever B > 256 so v7x's 2nd TensorCore is used
    #  - padded-row waste bounded by 7 rows per tile.
    n_tiles = int(pl.cdiv(B, max(8, int(tile_b))))
    if n_tiles == 1 and B > 256:
        n_tiles = 2
    tile_b = _round_up(pl.cdiv(B, n_tiles), 8)
    b_pad = n_tiles * tile_b
    if b_pad != B:
        x = jnp.pad(x, ((0, b_pad - B), (0, 0)))

    grid = (n_tiles,)
    const2 = lambda i: (0, 0)  # weights/biases: resident across all batch tiles

    # Advisory cost estimate so XLA can overlap this call with neighbors.
    flops = 2 * b_pad * (STATE_SIZE * HIDDEN + HIDDEN * HIDDEN + HIDDEN * ACTION_SIZE)
    transcendentals = b_pad * ACTION_SIZE
    weight_bytes = (STATE_SIZE * HIDDEN + HIDDEN * HIDDEN + HIDDEN * ACTION_SIZE) * 2 \
        + (HIDDEN + HIDDEN + ACTION_SIZE) * 4
    bytes_accessed = b_pad * (STATE_SIZE * 4 + ACTION_SIZE * 4) + weight_bytes

    # Default tile uses ~1 KB VMEM per row per step; only bump the scoped limit
    # (v5e default is 16 MiB) if a caller pushes the tile very large.
    vmem_limit = 64 * 1024 * 1024 if tile_b > 8192 else None

    probs = pl.pallas_call(
        _policy_kernel,
        out_shape=jax.ShapeDtypeStruct((b_pad, ACTION_SIZE), jnp.float32),
        grid=grid,
        in_specs=[
            pl.BlockSpec((tile_b, STATE_SIZE), lambda i: (i, 0)),
            pl.BlockSpec((STATE_SIZE, HIDDEN), const2),
            pl.BlockSpec((1, HIDDEN), const2),
            pl.BlockSpec((HIDDEN, HIDDEN), const2),
            pl.BlockSpec((1, HIDDEN), const2),
            pl.BlockSpec((HIDDEN, ACTION_SIZE), const2),
            pl.BlockSpec((1, ACTION_SIZE), const2),
        ],
        out_specs=pl.BlockSpec((tile_b, ACTION_SIZE), lambda i: (i, 0)),
        compiler_params=pltpu.CompilerParams(
            dimension_semantics=("parallel",),
            vmem_limit_bytes=vmem_limit,
        ),
        cost_estimate=pl.CostEstimate(
            flops=flops,
            transcendentals=transcendentals,
            bytes_accessed=bytes_accessed,
        ),
    )(x, w1, b1, w2, b2, w3, b3)

    return probs[:B]  # drop padded rows so they are never consumed downstream


def init_params(key):
    """Deterministic init mimicking PyTorch Linear defaults U(-1/sqrt(fan_in), +)."""
    ks = jax.random.split(key, 6)

    def lin(kw, kb, fan_in, fan_out):
        bound = 1.0 / jnp.sqrt(jnp.float32(fan_in))
        w = jax.random.uniform(kw, (fan_in, fan_out), jnp.float32, -bound, bound)
        b = jax.random.uniform(kb, (1, fan_out), jnp.float32, -bound, bound)
        return w, b

    w1, b1 = lin(ks[0], ks[1], STATE_SIZE, HIDDEN)
    w2, b2 = lin(ks[2], ks[3], HIDDEN, HIDDEN)
    w3, b3 = lin(ks[4], ks[5], HIDDEN, ACTION_SIZE)
    return {"w1": w1, "b1": b1, "w2": w2, "b2": b2, "w3": w3, "b3": b3}


def _reference_forward(state, params):
    """Pure-JAX f32 reference of the PyTorch forward."""
    h1 = jnp.maximum(state @ params["w1"] + params["b1"], 0.0)
    h2 = jnp.maximum(h1 @ params["w2"] + params["b2"], 0.0)
    logits = h2 @ params["w3"] + params["b3"]
    return jax.nn.softmax(logits, axis=-1)


if __name__ == "__main__":
    key = jax.random.PRNGKey(0)
    pkey, xkey = jax.random.split(key)
    params = init_params(pkey)

    batch = 8
    state = jax.random.normal(xkey, (batch, STATE_SIZE), dtype=jnp.float32)

    probs = policy_network_forward(state, params)
    probs = jax.block_until_ready(probs)

    # sanity: shape, probabilities sum to 1, and agreement with f32 reference
    assert probs.shape == (batch, ACTION_SIZE)
    row_sums = jnp.sum(probs, axis=-1)
    assert bool(jnp.all(jnp.abs(row_sums - 1.0) < 5e-3)), row_sums
    ref = _reference_forward(state, params)
    assert bool(jnp.all(jnp.abs(probs - ref) < 3e-2)), jnp.max(jnp.abs(probs - ref))

    # also exercise the padding + multi-tile (2-TensorCore) path
    state2 = jax.random.normal(jax.random.PRNGKey(1), (300, STATE_SIZE), jnp.float32)
    probs2 = jax.block_until_ready(policy_network_forward(state2, params))
    assert probs2.shape == (300, ACTION_SIZE)
    assert bool(jnp.all(jnp.abs(jnp.sum(probs2, axis=-1) - 1.0) < 5e-3))
    ref2 = _reference_forward(state2, params)
    assert bool(jnp.all(jnp.abs(probs2 - ref2) < 3e-2)), jnp.max(jnp.abs(probs2 - ref2))

    print("KERNEL_OK")
</pallas_src>

<mosaic_0001>
module attributes {stable_mosaic.version = 11 : i64} {
  func.func @_policy_kernel(%arg0: i32, %arg1: memref<8x8xf32, #tpu.memory_space<vmem>>, %arg2: memref<8x64xbf16, #tpu.memory_space<vmem>>, %arg3: memref<1x64xf32, #tpu.memory_space<vmem>>, %arg4: memref<64x64xbf16, #tpu.memory_space<vmem>>, %arg5: memref<1x64xf32, #tpu.memory_space<vmem>>, %arg6: memref<64x4xbf16, #tpu.memory_space<vmem>>, %arg7: memref<1x4xf32, #tpu.memory_space<vmem>>, %arg8: memref<8x4xf32, #tpu.memory_space<vmem>>) attributes {dimension_semantics = [#tpu.dimension_semantics<parallel>], iteration_bounds = array<i64: 1>, scalar_prefetch = 0 : i64, scratch_operands = 0 : i64, tpu.core_type = #tpu.core_type<tc>, window_params = [{transform_indices = @transform_0, window_bounds = array<i64: 8, 8>}, {pipeline_mode = #tpu.pipeline_mode<synchronous>, transform_indices = @transform_1, window_bounds = array<i64: 8, 64>}, {pipeline_mode = #tpu.pipeline_mode<synchronous>, transform_indices = @transform_2, window_bounds = array<i64: 1, 64>}, {pipeline_mode = #tpu.pipeline_mode<synchronous>, transform_indices = @transform_3, window_bounds = array<i64: 64, 64>}, {pipeline_mode = #tpu.pipeline_mode<synchronous>, transform_indices = @transform_4, window_bounds = array<i64: 1, 64>}, {pipeline_mode = #tpu.pipeline_mode<synchronous>, transform_indices = @transform_5, window_bounds = array<i64: 64, 4>}, {pipeline_mode = #tpu.pipeline_mode<synchronous>, transform_indices = @transform_6, window_bounds = array<i64: 1, 4>}, {transform_indices = @transform_7, window_bounds = array<i64: 8, 4>}]} {
    %c0 = arith.constant 0 : index
    %c0_0 = arith.constant 0 : index
    %0 = vector.load %arg1[%c0, %c0_0] : memref<8x8xf32, #tpu.memory_space<vmem>>, vector<8x8xf32>
    %1 = arith.truncf %0 : vector<8x8xf32> to vector<8x8xbf16>
    %c0_1 = arith.constant 0 : index
    %c0_2 = arith.constant 0 : index
    %2 = vector.load %arg2[%c0_1, %c0_2] : memref<8x64xbf16, #tpu.memory_space<vmem>>, vector<8x64xbf16>
    %cst = arith.constant dense<0.000000e+00> : vector<8x64xf32>
    %3 = tpu.matmul %1, %2, %cst {dimension_numbers = #tpu.dot_dimension_numbers<[1], [0], [0], [1], [0, 0, 1, 1], [], []>} : vector<8x8xbf16>, vector<8x64xbf16>, vector<8x64xf32> -> vector<8x64xf32>
    %c0_3 = arith.constant 0 : index
    %c0_4 = arith.constant 0 : index
    %4 = vector.load %arg3[%c0_3, %c0_4] : memref<1x64xf32, #tpu.memory_space<vmem>>, vector<1x64xf32>
    %5 = vector.broadcast %4 : vector<1x64xf32> to vector<8x64xf32>
    %6 = arith.addf %3, %5 : vector<8x64xf32>
    %cst_5 = arith.constant 0.000000e+00 : f32
    %7 = vector.broadcast %cst_5 : f32 to vector<8x64xf32>
    %8 = arith.maximumf %6, %7 : vector<8x64xf32>
    %9 = arith.truncf %8 : vector<8x64xf32> to vector<8x64xbf16>
    %c0_6 = arith.constant 0 : index
    %c0_7 = arith.constant 0 : index
    %10 = vector.load %arg4[%c0_6, %c0_7] : memref<64x64xbf16, #tpu.memory_space<vmem>>, vector<64x64xbf16>
    %cst_8 = arith.constant dense<0.000000e+00> : vector<8x64xf32>
    %11 = tpu.matmul %9, %10, %cst_8 {dimension_numbers = #tpu.dot_dimension_numbers<[1], [0], [0], [1], [0, 0, 1, 1], [], []>} : vector<8x64xbf16>, vector<64x64xbf16>, vector<8x64xf32> -> vector<8x64xf32>
    %c0_9 = arith.constant 0 : index
    %c0_10 = arith.constant 0 : index
    %12 = vector.load %arg5[%c0_9, %c0_10] : memref<1x64xf32, #tpu.memory_space<vmem>>, vector<1x64xf32>
    %13 = vector.broadcast %12 : vector<1x64xf32> to vector<8x64xf32>
    %14 = arith.addf %11, %13 : vector<8x64xf32>
    %cst_11 = arith.constant 0.000000e+00 : f32
    %15 = vector.broadcast %cst_11 : f32 to vector<8x64xf32>
    %16 = arith.maximumf %14, %15 : vector<8x64xf32>
    %17 = arith.truncf %16 : vector<8x64xf32> to vector<8x64xbf16>
    %c0_12 = arith.constant 0 : index
    %c0_13 = arith.constant 0 : index
    %18 = vector.load %arg6[%c0_12, %c0_13] : memref<64x4xbf16, #tpu.memory_space<vmem>>, vector<64x4xbf16>
    %cst_14 = arith.constant dense<0.000000e+00> : vector<8x4xf32>
    %19 = tpu.matmul %17, %18, %cst_14 {dimension_numbers = #tpu.dot_dimension_numbers<[1], [0], [0], [1], [0, 0, 1, 1], [], []>} : vector<8x64xbf16>, vector<64x4xbf16>, vector<8x4xf32> -> vector<8x4xf32>
    %c0_15 = arith.constant 0 : index
    %c0_16 = arith.constant 0 : index
    %20 = vector.load %arg7[%c0_15, %c0_16] : memref<1x4xf32, #tpu.memory_space<vmem>>, vector<1x4xf32>
    %21 = vector.broadcast %20 : vector<1x4xf32> to vector<8x4xf32>
    %22 = arith.addf %19, %21 : vector<8x4xf32>
    %cst_17 = arith.constant dense<0xFF800000> : vector<8xf32>
    %23 = vector.multi_reduction <maximumf>, %22, %cst_17 [1] : vector<8x4xf32> to vector<8xf32>
    %24 = vector.shape_cast %23 : vector<8xf32> to vector<8x1xf32>
    %25 = vector.broadcast %24 : vector<8x1xf32> to vector<8x4xf32>
    %26 = arith.subf %22, %25 : vector<8x4xf32>
    %27 = math.exp %26 : vector<8x4xf32>
    %cst_18 = arith.constant dense<0.000000e+00> : vector<8xf32>
    %28 = vector.multi_reduction <add>, %27, %cst_18 [1] : vector<8x4xf32> to vector<8xf32>
    %29 = vector.shape_cast %28 : vector<8xf32> to vector<8x1xf32>
    %30 = tpu.reciprocal %29 : vector<8x1xf32> -> vector<8x1xf32>
    %31 = vector.broadcast %30 : vector<8x1xf32> to vector<8x4xf32>
    %32 = arith.mulf %27, %31 : vector<8x4xf32>
    %c0_19 = arith.constant 0 : index
    %c0_20 = arith.constant 0 : index
    %33 = vector.load %arg8[%c0_19, %c0_20] : memref<8x4xf32, #tpu.memory_space<vmem>>, vector<8x4xf32>
    tpu.vector_store %arg8[%c0_19, %c0_20], %32 {strides = array<i32>} : memref<8x4xf32, #tpu.memory_space<vmem>>, vector<8x4xf32>,
    return
  }
  func.func @transform_0(%arg0: i32) -> (i32, i32) {
    %c0_i32 = arith.constant 0 : i32
    %c0_i32_0 = arith.constant 0 : i32
    return %arg0, %c0_i32 : i32, i32
  }
  func.func @transform_1(%arg0: i32) -> (i32, i32) {
    %c0_i32 = arith.constant 0 : i32
    %c0_i32_0 = arith.constant 0 : i32
    %c0_i32_1 = arith.constant 0 : i32
    return %c0_i32, %c0_i32_0 : i32, i32
  }
  func.func @transform_2(%arg0: i32) -> (i32, i32) {
    %c0_i32 = arith.constant 0 : i32
    %c0_i32_0 = arith.constant 0 : i32
    %c0_i32_1 = arith.constant 0 : i32
    return %c0_i32, %c0_i32_0 : i32, i32
  }
  func.func @transform_3(%arg0: i32) -> (i32, i32) {
    %c0_i32 = arith.constant 0 : i32
    %c0_i32_0 = arith.constant 0 : i32
    %c0_i32_1 = arith.constant 0 : i32
    return %c0_i32, %c0_i32_0 : i32, i32
  }
  func.func @transform_4(%arg0: i32) -> (i32, i32) {
    %c0_i32 = arith.constant 0 : i32
    %c0_i32_0 = arith.constant 0 : i32
    %c0_i32_1 = arith.constant 0 : i32
    return %c0_i32, %c0_i32_0 : i32, i32
  }
  func.func @transform_5(%arg0: i32) -> (i32, i32) {
    %c0_i32 = arith.constant 0 : i32
    %c0_i32_0 = arith.constant 0 : i32
    %c0_i32_1 = arith.constant 0 : i32
    return %c0_i32, %c0_i32_0 : i32, i32
  }
  func.func @transform_6(%arg0: i32) -> (i32, i32) {
    %c0_i32 = arith.constant 0 : i32
    %c0_i32_0 = arith.constant 0 : i32
    %c0_i32_1 = arith.constant 0 : i32
    return %c0_i32, %c0_i32_0 : i32, i32
  }
  func.func @transform_7(%arg0: i32) -> (i32, i32) {
    %c0_i32 = arith.constant 0 : i32
    %c0_i32_0 = arith.constant 0 : i32
    return %arg0, %c0_i32 : i32, i32
  }
}

</mosaic_0001>

<llo_original>
// kernel: tpu_custom_call.1
$region0: #{tpu_custom_call.1}
  #allocation0 [shape = 'u32[]', space=smem, size = 0x4, offset = 0x4, fixed_abs, tag = 'smem constant byte address 0x4 - core index']
  #allocation1 [shape = 'u32[144,128]{1,0:T(1,128)}', space=vmem, size = 0x12000, scoped, tag = 'internal scratch']
  %s0 = inlined_call_operand.hbm [shape: f32[8,8], index: 0, kind: input, shape index: {}]
  %s1 = inlined_call_operand.vmem [shape: bf16[8,64], index: 1, kind: input, shape index: {}]
  %s2 = inlined_call_operand.vmem [shape: f32[1,64], index: 2, kind: input, shape index: {}]
  %s3 = inlined_call_operand.vmem [shape: bf16[64,64], index: 3, kind: input, shape index: {}]
  %s4 = inlined_call_operand.vmem [shape: f32[1,64], index: 4, kind: input, shape index: {}]
  %s5 = inlined_call_operand.vmem [shape: bf16[64,4], index: 5, kind: input, shape index: {}]
  %s6 = inlined_call_operand.vmem [shape: f32[1,4], index: 6, kind: input, shape index: {}]
  %s7 = inlined_call_operand.vmem [shape: f32[8,4], index: 7, kind: output, shape index: {}]
  %s8 = sld [smem:[#allocation0]]
  $region42: #{tpu_custom_call.1} parent=0
    _
  %s10 = ssub.s32 1, %s8
  %s11 = scalar_select 0, %s10, %s8
  $region1: #{tpu_custom_call.1} parent=0
    #allocation2 [shape = 'u8[4096]{0}', space=vmem, size = 0x1000, scoped, tag = 'input window, operand 0, single buffered']
    #allocation3 [shape = 's32[1]{0}', space=sflag, size = 0x4, scoped, tag = 'scoped memory for tpu_custom_call.1']
    %12 = vsyncpa [#allocation3], 0
    // Predicated region
    $region2: #{tpu_custom_call.1} parent=1 // pred_check
      _
    $region3: #{tpu_custom_call.1} parent=1 // pred_check_branch
      %14 = sbr.rel (0) target = $region5
    $region4: #{tpu_custom_call.1} parent=1 // pred_region
      %s16 = ssub.s32 128, 128
      %17 = vsyncadd [#allocation3], %s16
      %s19 = sshll.u32 [#allocation2], 4
      %s20 = int_to_ptr.vmem [resolvable:$true] %s19
      %22 = dma.hbm_to_vmem [thread:$0]  %s0, 128, %s20, [#allocation3]
    $region5: #{tpu_custom_call.1} parent=1 // pred_fallthru
      _
    // Predicated region
    $region6: #{tpu_custom_call.1} parent=1 // pred_check
      _
    $region7: #{tpu_custom_call.1} parent=1 // pred_check_branch
      %24 = sbr.rel (0) target = $region9
    $region8: #{tpu_custom_call.1} parent=1 // pred_region
      _
    $region9: #{tpu_custom_call.1} parent=1 // pred_fallthru
      _
    // Predicated region
    $region10: #{tpu_custom_call.1} parent=1 // pred_check
      _
    $region11: #{tpu_custom_call.1} parent=1 // pred_check_branch
      %26 = sbr.rel (0) target = $region13
    $region12: #{tpu_custom_call.1} parent=1 // pred_region
      _
    $region13: #{tpu_custom_call.1} parent=1 // pred_fallthru
      _
    // Predicated region
    $region14: #{tpu_custom_call.1} parent=1 // pred_check
      _
    $region15: #{tpu_custom_call.1} parent=1 // pred_check_branch
      %28 = sbr.rel (0) target = $region17
    $region16: #{tpu_custom_call.1} parent=1 // pred_region
      _
    $region17: #{tpu_custom_call.1} parent=1 // pred_fallthru
      _
    // Predicated region
    $region18: #{tpu_custom_call.1} parent=1 // pred_check
      _
    $region19: #{tpu_custom_call.1} parent=1 // pred_check_branch
      %30 = sbr.rel (0) target = $region21
    $region20: #{tpu_custom_call.1} parent=1 // pred_region
      _
    $region21: #{tpu_custom_call.1} parent=1 // pred_fallthru
      _
    // Predicated region
    $region22: #{tpu_custom_call.1} parent=1 // pred_check
      _
    $region23: #{tpu_custom_call.1} parent=1 // pred_check_branch
      %32 = sbr.rel (0) target = $region25
    $region24: #{tpu_custom_call.1} parent=1 // pred_region
      _
    $region25: #{tpu_custom_call.1} parent=1 // pred_fallthru
      _
    // Predicated region
    $region26: #{tpu_custom_call.1} parent=1 // pred_check
      _
    $region27: #{tpu_custom_call.1} parent=1 // pred_check_branch
      %34 = sbr.rel (0) target = $region29
    $region28: #{tpu_custom_call.1} parent=1 // pred_region
      _
    $region29: #{tpu_custom_call.1} parent=1 // pred_fallthru
      _
    // Predicated region
    $region30: #{tpu_custom_call.1} parent=1 // pred_check
      _
    $region31: #{tpu_custom_call.1} parent=1 // pred_check_branch
      %36 = sbr.rel (0) target = $region33
    $region32: #{tpu_custom_call.1} parent=1 // pred_region
      %37 = dma.done [#allocation3], 128
    $region33: #{tpu_custom_call.1} parent=1 // pred_fallthru
      _
    %v39 = vld [vmem:[#allocation2] sm:$0xff]
    %v40 = vpack.c.bf16 %v39, %v39
    %v41 = vld [vmem:[%s1] sm:$0xf]
    %v42 = vld [vmem:[%s2] sm:$0x1]
    %v44 = vlaneseq
    %v45 = vshrl.u32 %v44, 7
    %v46 = vsub.s32 0, %v45
    %v47 = vrot.slane %v42, %v46
    %vm49 = vcmask 64512
    %v51 = vsel %vm49, %v40, 0
    %vm53 = vcmask 1043456
    %v55 = vsel %vm53, %v41, 0
    %57 = vmatprep.subr.bf16.mxu0 0
    %58 = vmatpush1.bf16.msra.mxu0 0
    %59 = vmatprep.subr.bf16.mxu0 0
    %60 = vmatpush1.bf16.msra.mxu0 0
    %61 = vmatprep.subr.bf16.mxu0 0
    %62 = vmatpush1.bf16.msra.mxu0 0
    %63 = vmatprep.subr.bf16.mxu0 0
    %64 = vmatpush1.bf16.msra.mxu0 0
    %65 = vmatprep.subr.bf16.mxu0 0
    %66 = vmatpush1.bf16.msra.mxu0 0
    %67 = vmatprep.subr.bf16.mxu0 0
    %68 = vmatpush1.bf16.msra.mxu0 0
    %69 = vmatprep.subr.bf16.mxu0 0
    %70 = vmatpush1.bf16.msra.mxu0 0
    %71 = vmatprep.subr.bf16.mxu0 0
    %72 = vmatpush1.bf16.msra.mxu0 %v55
    %73 = vmatprep.subr.bf16.mxu0 0
    %74 = vmatpush2.bf16.msra.mxu0 0
    %75 = vmatprep.subr.bf16.mxu0 0
    %76 = vmatpush2.bf16.msra.mxu0 0
    %77 = vmatprep.subr.bf16.mxu0 0
    %78 = vmatpush2.bf16.msra.mxu0 0
    %79 = vmatprep.subr.bf16.mxu0 0
    %80 = vmatpush2.bf16.msra.mxu0 0
    %81 = vmatprep.subr.bf16.mxu0 0
    %82 = vmatpush2.bf16.msra.mxu0 0
    %83 = vmatprep.subr.bf16.mxu0 0
    %84 = vmatpush2.bf16.msra.mxu0 0
    %85 = vmatprep.subr.bf16.mxu0 0
    %86 = vmatpush2.bf16.msra.mxu0 0
    %87 = vmatprep.subr.bf16.mxu0 0
    %88 = vmatpush2.bf16.msra.mxu0 0
    %89 = vmatprep.mubr.bf16.mxu0 0
    %90 = vmatmul.mubr.bf16.gmra.mxu0 %v51
    %v91 = vpop.f32.mrf.mxu0
    %v92 = vadd.f32 %v47, %v91
    %v93 = vpop.f32.mrf.mxu0
    %v94 = vpop.f32.mrf.mxu0
    %v95 = vpop.f32.mrf.mxu0
    %96 = vdwg.mxu0
    %v97 = vmax.f32 %v92, 0.0
    %v98 = vpack.c.bf16 %v97, %v97
    %v99 = vld [vmem:[%s3] sm:$0xf]
    %v100 = vld [vmem:[%s3 + $0x4] sm:$0xf]
    %v101 = vld [vmem:[%s3 + $0x8] sm:$0xf]
    %v102 = vld [vmem:[%s3 + $0xc] sm:$0xf]
    %v103 = vld [vmem:[%s3 + $0x10] sm:$0xf]
    %v104 = vld [vmem:[%s3 + $0x14] sm:$0xf]
    %v105 = vld [vmem:[%s3 + $0x18] sm:$0xf]
    %v106 = vld [vmem:[%s3 + $0x1c] sm:$0xf]
    %v107 = vld [vmem:[%s4] sm:$0x1]
    %v109 = vlaneseq
    %v110 = vshrl.u32 %v109, 7
    %v111 = vsub.s32 0, %v110
    %v112 = vrot.slane %v107, %v111
    %v122 = vunpack.c.l.b16 %v99
    %v123 = vunpack.c.l.b16 %v100
    %v124 = vunpack.c.l.b16 %v101
    %v125 = vunpack.c.l.b16 %v102
    %v126 = vunpack.c.l.b16 %v103
    %v127 = vunpack.c.l.b16 %v104
    %v128 = vunpack.c.l.b16 %v105
    %v129 = vunpack.c.l.b16 %v106
    %v130 = vpack.c.b16 %v123, %v122
    %v131 = vpack.c.b16 %v125, %v124
    %v132 = vpack.c.b16 %v127, %v126
    %v133 = vpack.c.b16 %v129, %v128
    %vm138 = vcmask 523264
    %v140 = vsel %vm138, %v98, 0
    %142 = vmatprep.subr.bf16.mxu0 0
    %143 = vmatpush1.bf16.msra.mxu0 0
    %144 = vmatprep.subr.bf16.mxu0 0
    %145 = vmatpush1.bf16.msra.mxu0 0
    %146 = vmatprep.subr.bf16.mxu0 0
    %147 = vmatpush1.bf16.msra.mxu0 0
    %148 = vmatprep.subr.bf16.mxu0 0
    %149 = vmatpush1.bf16.msra.mxu0 0
    %150 = vmatprep.subr.bf16.mxu0 0
    %151 = vmatpush1.bf16.msra.mxu0 %v133
    %152 = vmatprep.subr.bf16.mxu0 0
    %153 = vmatpush1.bf16.msra.mxu0 %v132
    %154 = vmatprep.subr.bf16.mxu0 0
    %155 = vmatpush1.bf16.msra.mxu0 %v131
    %156 = vmatprep.subr.bf16.mxu0 0
    %157 = vmatpush1.bf16.msra.mxu0 %v130
    %158 = vmatprep.subr.bf16.mxu0 0
    %159 = vmatpush2.bf16.msra.mxu0 0
    %160 = vmatprep.subr.bf16.mxu0 0
    %161 = vmatpush2.bf16.msra.mxu0 0
    %162 = vmatprep.subr.bf16.mxu0 0
    %163 = vmatpush2.bf16.msra.mxu0 0
    %164 = vmatprep.subr.bf16.mxu0 0
    %165 = vmatpush2.bf16.msra.mxu0 0
    %166 = vmatprep.subr.bf16.mxu0 0
    %167 = vmatpush2.bf16.msra.mxu0 0
    %168 = vmatprep.subr.bf16.mxu0 0
    %169 = vmatpush2.bf16.msra.mxu0 0
    %170 = vmatprep.subr.bf16.mxu0 0
    %171 = vmatpush2.bf16.msra.mxu0 0
    %172 = vmatprep.subr.bf16.mxu0 0
    %173 = vmatpush2.bf16.msra.mxu0 0
    %174 = vmatprep.mubr.bf16.mxu0 0
    %175 = vmatmul.mubr.bf16.gmra.mxu0 %v140
    %v176 = vpop.f32.mrf.mxu0
    %v177 = vadd.f32 %v112, %v176
    %v178 = vpop.f32.mrf.mxu0
    %v179 = vpop.f32.mrf.mxu0
    %v180 = vpop.f32.mrf.mxu0
    %181 = vdwg.mxu0
    %v182 = vmax.f32 %v177, 0.0
    %v183 = vpack.c.bf16 %v182, %v182
    %v184 = vld [vmem:[%s5] sm:$0xf]
    %v185 = vld [vmem:[%s5 + $0x4] sm:$0xf]
    %v186 = vld [vmem:[%s5 + $0x8] sm:$0xf]
    %v187 = vld [vmem:[%s5 + $0xc] sm:$0xf]
    %v188 = vld [vmem:[%s5 + $0x10] sm:$0xf]
    %v189 = vld [vmem:[%s5 + $0x14] sm:$0xf]
    %v190 = vld [vmem:[%s5 + $0x18] sm:$0xf]
    %v191 = vld [vmem:[%s5 + $0x1c] sm:$0xf]
    %v192 = vld [vmem:[%s6] sm:$0x1]
    %v194 = vlaneseq
    %v195 = vshrl.u32 %v194, 7
    %v196 = vsub.s32 0, %v195
    %v197 = vrot.slane %v192, %v196
    %v207 = vunpack.c.l.b16 %v184
    %v208 = vunpack.c.l.b16 %v185
    %v209 = vunpack.c.l.b16 %v186
    %v210 = vunpack.c.l.b16 %v187
    %v211 = vunpack.c.l.b16 %v188
    %v212 = vunpack.c.l.b16 %v189
    %v213 = vunpack.c.l.b16 %v190
    %v214 = vunpack.c.l.b16 %v191
    %v215 = vpack.c.b16 %v208, %v207
    %v216 = vpack.c.b16 %v210, %v209
    %v217 = vpack.c.b16 %v212, %v211
    %v218 = vpack.c.b16 %v214, %v213
    %v224 = vsel %vm138, %v183, 0
    %226 = vmatprep.subr.bf16.mxu0 0
    %227 = vmatpush1.bf16.msra.mxu0 0
    %228 = vmatprep.subr.bf16.mxu0 0
    %229 = vmatpush1.bf16.msra.mxu0 0
    %230 = vmatprep.subr.bf16.mxu0 0
    %231 = vmatpush1.bf16.msra.mxu0 0
    %232 = vmatprep.subr.bf16.mxu0 0
    %233 = vmatpush1.bf16.msra.mxu0 0
    %234 = vmatprep.subr.bf16.mxu0 0
    %235 = vmatpush1.bf16.msra.mxu0 %v218
    %236 = vmatprep.subr.bf16.mxu0 0
    %237 = vmatpush1.bf16.msra.mxu0 %v217
    %238 = vmatprep.subr.bf16.mxu0 0
    %239 = vmatpush1.bf16.msra.mxu0 %v216
    %240 = vmatprep.subr.bf16.mxu0 0
    %241 = vmatpush1.bf16.msra.mxu0 %v215
    %242 = vmatprep.subr.bf16.mxu0 0
    %243 = vmatpush2.bf16.msra.mxu0 0
    %244 = vmatprep.subr.bf16.mxu0 0
    %245 = vmatpush2.bf16.msra.mxu0 0
    %246 = vmatprep.subr.bf16.mxu0 0
    %247 = vmatpush2.bf16.msra.mxu0 0
    %248 = vmatprep.subr.bf16.mxu0 0
    %249 = vmatpush2.bf16.msra.mxu0 0
    %250 = vmatprep.subr.bf16.mxu0 0
    %251 = vmatpush2.bf16.msra.mxu0 0
    %252 = vmatprep.subr.bf16.mxu0 0
    %253 = vmatpush2.bf16.msra.mxu0 0
    %254 = vmatprep.subr.bf16.mxu0 0
    %255 = vmatpush2.bf16.msra.mxu0 0
    %256 = vmatprep.subr.bf16.mxu0 0
    %257 = vmatpush2.bf16.msra.mxu0 0
    %258 = vmatprep.mubr.bf16.mxu0 0
    %259 = vmatmul.mubr.bf16.gmra.mxu0 %v224
    %v260 = vpop.f32.mrf.mxu0
    %v261 = vadd.f32 %v197, %v260
    %v262 = vpop.f32.mrf.mxu0
    %v263 = vpop.f32.mrf.mxu0
    %v264 = vpop.f32.mrf.mxu0
    %265 = vdwg.mxu0
    %vm266 = vcmask 31744
    %v267 = vsel %vm266, %v261, -inf
    %268 = vmax.xlane.f32.xlu0 %v267
    %v269 = vpop.xlane.xlu0 %268
    %v270 = vsub.f32 %v261, %v269
    %v271 = vmul.f32 %v270, 1.442695
    %v272 = vpow.pop %v271
    %v273 = vsel %vm266, %v272, 0.0
    %274 = vadd.xlane.f32.xlu0 %v273
    %v275 = vpop.xlane.xlu0 %274
    %v276 = vrcp.pop %v275
    %v277 = vmul.f32 %v272, %v276
    %278 = vst.msk [vmem:[%s7] sm:$0xff] %vm266, %v277
    // Predicated region
    $region34: #{tpu_custom_call.1} parent=1 // pred_check
      _
    $region35: #{tpu_custom_call.1} parent=1 // pred_check_branch
      %280 = sbr.rel (0) target = $region37
    $region36: #{tpu_custom_call.1} parent=1 // pred_region
      _
    $region37: #{tpu_custom_call.1} parent=1 // pred_fallthru
      _
    // Predicated region
    $region38: #{tpu_custom_call.1} parent=1 // pred_check
      _
    $region39: #{tpu_custom_call.1} parent=1 // pred_check_branch
      %282 = sbr.rel (0) target = $region41
    $region40: #{tpu_custom_call.1} parent=1 // pred_region
      _
    $region41: #{tpu_custom_call.1} parent=1 // pred_fallthru
      _
    %283 = vsyncpa [#allocation3], 1

</llo_original>
